<compile_context>
chip_gen: v7x
topology: tpu7x:2x2x1
jax: 0.10.0
libtpu: 0.0.40
codegen_flags: <defaults>
</compile_context>

<pallas_src>
import functools

import jax
import jax.numpy as jnp
import numpy as np
from jax.experimental import pallas as pl
from jax.experimental.pallas import tpu as pltpu

EPS = 1e-5


# ----------------------------------------------------------------------------
# Pallas kernel: per-(batch, channel-tile) instance norm + affine
# ----------------------------------------------------------------------------
def _adain_kernel(x_ref, g_ref, b_ref, o_ref, *, eps):
    x = x_ref[...].astype(jnp.float32)                    # (1, Cb, HW)
    hw = x.shape[-1]
    mean = jnp.mean(x, axis=-1, keepdims=True)            # (1, Cb, 1)  XLU reduce
    xc = x - mean
    # torch.var(dim=[2,3]) is unbiased by default -> divide by (HW - 1).
    var = jnp.sum(xc * xc, axis=-1, keepdims=True) * (1.0 / (hw - 1))
    rstd = jax.lax.rsqrt(var + eps)                       # EUP, free-ish slot
    scale = rstd * g_ref[...].astype(jnp.float32)         # (1, Cb, 1)
    shift = b_ref[...].astype(jnp.float32)                # (1, Cb, 1)
    o_ref[...] = (xc * scale + shift).astype(o_ref.dtype)  # lane-dense store


# ----------------------------------------------------------------------------
# tiling helper
# ----------------------------------------------------------------------------
def _channel_block(C, HW, itemsize, vmem_budget=4 * 1024 * 1024):
    """Largest channel tile that divides C, is sublane-aligned, fits the budget."""
    if C % 8 != 0:
        return C                      # small / odd C: whole channel dim in one block
    max_cb = max(8, vmem_budget // max(1, HW * itemsize))
    cb = min(C, (max_cb // 8) * 8)
    while cb > 8 and C % cb != 0:
        cb -= 8
    return cb


# ----------------------------------------------------------------------------
# public wrapper (PyTorch-convention NCHW input, (N, C) gamma / beta)
# ----------------------------------------------------------------------------
@functools.partial(jax.jit, static_argnames=("eps",))
def adain(x, gamma, beta, *, eps=EPS):
    N, C, H, W = x.shape
    HW = H * W
    # TODO(synk): extremely large H*W per channel-tile (beyond VMEM) would need a
    # two-pass spatial reduction; not needed at these sizes.
    x2 = x.reshape(N, C, HW)                               # free view of NCHW
    g = gamma.reshape(N, C, 1)
    b = beta.reshape(N, C, 1)

    cb = _channel_block(C, HW, jnp.dtype(x.dtype).itemsize)
    grid = (N, C // cb)

    out = pl.pallas_call(
        functools.partial(_adain_kernel, eps=eps),
        out_shape=jax.ShapeDtypeStruct((N, C, HW), x.dtype),
        grid_spec=pltpu.PrefetchScalarGridSpec(
            num_scalar_prefetch=0,
            grid=grid,
            in_specs=[
                pl.BlockSpec((1, cb, HW), lambda n, c: (n, c, 0)),
                pl.BlockSpec((1, cb, 1), lambda n, c: (n, c, 0)),
                pl.BlockSpec((1, cb, 1), lambda n, c: (n, c, 0)),
            ],
            out_specs=pl.BlockSpec((1, cb, HW), lambda n, c: (n, c, 0)),
        ),
        compiler_params=pltpu.CompilerParams(
            dimension_semantics=("parallel", "parallel")),
    )(x2, g, b)
    return out.reshape(N, C, H, W)


# ----------------------------------------------------------------------------
# plain-JAX reference (mirrors the PyTorch module)
# ----------------------------------------------------------------------------
def adain_reference(x, gamma, beta, eps=EPS):
    mean = jnp.mean(x, axis=(2, 3), keepdims=True)
    var = jnp.var(x, axis=(2, 3), keepdims=True, ddof=1)   # torch.var: unbiased
    out = (x - mean) / jnp.sqrt(var + eps)
    return out * gamma[:, :, None, None] + beta[:, :, None, None]


# ----------------------------------------------------------------------------
if __name__ == "__main__":
    key = jax.random.PRNGKey(0)
    kx, kg, kb = jax.random.split(key, 3)

    N, C, H, W = 2, 4, 16, 16
    x = jax.random.normal(kx, (N, C, H, W), jnp.float32)
    gamma = 1.0 + 0.1 * jax.random.normal(kg, (N, C), jnp.float32)
    beta = 0.1 * jax.random.normal(kb, (N, C), jnp.float32)

    out = adain(x, gamma, beta)
    out = jax.block_until_ready(out)
    assert out.shape == (N, C, H, W), out.shape

    ref = adain_reference(x, gamma, beta)
    np.testing.assert_allclose(np.asarray(out), np.asarray(ref),
                               rtol=1e-4, atol=1e-4)

    print("KERNEL_OK")
</pallas_src>

<mosaic_0001>
module attributes {stable_mosaic.version = 11 : i64} {
  func.func @_adain_kernel(%arg0: i32, %arg1: i32, %arg2: memref<1x4x256xf32, #tpu.memory_space<vmem>>, %arg3: memref<1x4x1xf32, #tpu.memory_space<vmem>>, %arg4: memref<1x4x1xf32, #tpu.memory_space<vmem>>, %arg5: memref<1x4x256xf32, #tpu.memory_space<vmem>>) attributes {dimension_semantics = [#tpu.dimension_semantics<parallel>, #tpu.dimension_semantics<parallel>], iteration_bounds = array<i64: 2, 1>, scalar_prefetch = 0 : i64, scratch_operands = 0 : i64, tpu.core_type = #tpu.core_type<tc>, window_params = [{transform_indices = @transform_0, window_bounds = array<i64: 1, 4, 256>}, {transform_indices = @transform_1, window_bounds = array<i64: 1, 4, 1>}, {transform_indices = @transform_2, window_bounds = array<i64: 1, 4, 1>}, {transform_indices = @transform_3, window_bounds = array<i64: 1, 4, 256>}]} {
    %c0 = arith.constant 0 : index
    %c0_0 = arith.constant 0 : index
    %c0_1 = arith.constant 0 : index
    %0 = vector.load %arg2[%c0, %c0_0, %c0_1] : memref<1x4x256xf32, #tpu.memory_space<vmem>>, vector<1x4x256xf32>
    %cst = arith.constant dense<0.000000e+00> : vector<1x4xf32>
    %1 = vector.multi_reduction <add>, %0, %cst [2] : vector<1x4x256xf32> to vector<1x4xf32>
    %2 = vector.shape_cast %1 : vector<1x4xf32> to vector<1x4x1xf32>
    %cst_2 = arith.constant 2.560000e+02 : f32
    %3 = vector.broadcast %cst_2 : f32 to vector<1x4x1xf32>
    %4 = arith.divf %2, %3 : vector<1x4x1xf32>
    %5 = vector.broadcast %4 : vector<1x4x1xf32> to vector<1x4x256xf32>
    %6 = arith.subf %0, %5 : vector<1x4x256xf32>
    %7 = arith.mulf %6, %6 : vector<1x4x256xf32>
    %cst_3 = arith.constant dense<0.000000e+00> : vector<1x4xf32>
    %8 = vector.multi_reduction <add>, %7, %cst_3 [2] : vector<1x4x256xf32> to vector<1x4xf32>
    %9 = vector.shape_cast %8 : vector<1x4xf32> to vector<1x4x1xf32>
    %cst_4 = arith.constant 0.00392156886 : f32
    %10 = vector.broadcast %cst_4 : f32 to vector<1x4x1xf32>
    %11 = arith.mulf %9, %10 : vector<1x4x1xf32>
    %cst_5 = arith.constant 9.99999974E-6 : f32
    %12 = vector.broadcast %cst_5 : f32 to vector<1x4x1xf32>
    %13 = arith.addf %11, %12 : vector<1x4x1xf32>
    %14 = math.rsqrt %13 : vector<1x4x1xf32>
    %c0_6 = arith.constant 0 : index
    %c0_7 = arith.constant 0 : index
    %c0_8 = arith.constant 0 : index
    %15 = vector.load %arg3[%c0_6, %c0_7, %c0_8] : memref<1x4x1xf32, #tpu.memory_space<vmem>>, vector<1x4x1xf32>
    %16 = arith.mulf %14, %15 : vector<1x4x1xf32>
    %c0_9 = arith.constant 0 : index
    %c0_10 = arith.constant 0 : index
    %c0_11 = arith.constant 0 : index
    %17 = vector.load %arg4[%c0_9, %c0_10, %c0_11] : memref<1x4x1xf32, #tpu.memory_space<vmem>>, vector<1x4x1xf32>
    %18 = vector.broadcast %16 : vector<1x4x1xf32> to vector<1x4x256xf32>
    %19 = arith.mulf %6, %18 : vector<1x4x256xf32>
    %20 = vector.broadcast %17 : vector<1x4x1xf32> to vector<1x4x256xf32>
    %21 = arith.addf %19, %20 : vector<1x4x256xf32>
    %c0_12 = arith.constant 0 : index
    %c0_13 = arith.constant 0 : index
    %c0_14 = arith.constant 0 : index
    %22 = vector.load %arg5[%c0_12, %c0_13, %c0_14] : memref<1x4x256xf32, #tpu.memory_space<vmem>>, vector<1x4x256xf32>
    tpu.vector_store %arg5[%c0_12, %c0_13, %c0_14], %21 {strides = array<i32>} : memref<1x4x256xf32, #tpu.memory_space<vmem>>, vector<1x4x256xf32>,
    return
  }
  func.func @transform_0(%arg0: i32, %arg1: i32) -> (i32, i32, i32) {
    %c0_i32 = arith.constant 0 : i32
    %c0_i32_0 = arith.constant 0 : i32
    return %arg0, %arg1, %c0_i32 : i32, i32, i32
  }
  func.func @transform_1(%arg0: i32, %arg1: i32) -> (i32, i32, i32) {
    %c0_i32 = arith.constant 0 : i32
    %c0_i32_0 = arith.constant 0 : i32
    return %arg0, %arg1, %c0_i32 : i32, i32, i32
  }
  func.func @transform_2(%arg0: i32, %arg1: i32) -> (i32, i32, i32) {
    %c0_i32 = arith.constant 0 : i32
    %c0_i32_0 = arith.constant 0 : i32
    return %arg0, %arg1, %c0_i32 : i32, i32, i32
  }
  func.func @transform_3(%arg0: i32, %arg1: i32) -> (i32, i32, i32) {
    %c0_i32 = arith.constant 0 : i32
    %c0_i32_0 = arith.constant 0 : i32
    return %arg0, %arg1, %c0_i32 : i32, i32, i32
  }
}

</mosaic_0001>

<llo_original>
// kernel: adain.1
$region0: #{adain.1}
  #allocation0 [shape = 'u32[]', space=smem, size = 0x4, offset = 0x4, fixed_abs, tag = 'smem constant byte address 0x4 - core index']
  #allocation1 [shape = 'u32[144,128]{1,0:T(1,128)}', space=vmem, size = 0x12000, scoped, tag = 'internal scratch']
  %s0 = inlined_call_operand.vmem [shape: f32[2,4,256], index: 0, kind: input, shape index: {}]
  %s1 = inlined_call_operand.vmem [shape: f32[2,4,1], index: 1, kind: input, shape index: {}]
  %s2 = inlined_call_operand.vmem [shape: f32[2,4,1], index: 2, kind: input, shape index: {}]
  %s3 = inlined_call_operand.vmem [shape: f32[2,4,256], index: 3, kind: output, shape index: {}]
  %s4 = sld [smem:[#allocation0]]
  $region45: #{adain.1} parent=0
    _
  %s6 = ssub.s32 1, %s4
  %s7 = scalar_select 0, %s6, %s4
  loop: start=0, step=1, limit=4
  $region2: #{adain.1} parent=0 // loop_pre_header
    _
  $region3: #{adain.1} parent=0 // loop_header
    %s9 = sphi 0, %s13
    %p10 = scmp.ge.s32.totalorder %s9, 4
    %s16 = sphi 0, %s28
    %s17 = sphi 0, %s24
    %s18 = sphi 0, %s16
    %s19 = sphi 0, %s17
    %s20 = sphi 0, %s18
    %s21 = sphi 0, %s19
    %s33 = sphi 0, %s35
    %s36 = sphi 0, %s33
    %s37 = sphi 0, %s36
    %s53 = sphi 0, %s37
    %s61 = sphi 0, %s63
    %s64 = sphi 0, %s61
    %s65 = sphi 0, %s64
    %s81 = sphi 0, %s65
    %s89 = sphi 0, %s91
    %s92 = sphi 0, %s89
    %s93 = sphi 0, %s92
    %s109 = sphi 0, %s93
    %s117 = sphi 0, %s119
    %s120 = sphi 0, %s117
    %s121 = sphi 0, %s120
    %s137 = sphi 0, %s121
  $region4: #{adain.1} parent=0 // loop_header_branch
    %12 = sbr.rel (%p10) target = $region8
  $region5: #{adain.1} parent=0 // loop_body
    %s14 = ssub.s32 %s9, 1
    %s15 = ssub.s32 %s9, 2
    %s22 = sadd.s32 1, %s17
    %p23 = scmp.ge.s32.totalorder %s22, 1
    %s24 = scalar_select %p23, 0, %s22
    %s25 = sadd.s32 1, %s16
    %s26 = scalar_select %p23, %s25, %s16
    %p27 = scmp.ge.s32.totalorder %s26, 2
    %s28 = scalar_select %p27, 0, %s26
    %s29 = ssub.s32 %s16, %s28
    %s30 = ssub.s32 %s17, %s24
    %s31 = sor.u32 %s29, %s30
    %p32 = scmp.eq.s32.totalorder %s31, 0
    %s34 = sadd.s32 %s33, 1
    %s35 = scalar_select %p32, %s33, %s34
    %p38 = pneg %p32
    %p39 = scmp.eq.s32.totalorder %s9, 1
    %p40 = por %p38, %p39
    %p41 = scmp.ne.s32.totalorder %s33, %s36
    %p42 = scmp.eq.s32.totalorder %s9, 0
    %p43 = por %p41, %p42
    %p44 = scmp.ne.s32.totalorder %s33, %s36
    %p45 = scmp.eq.s32.totalorder %s14, 1
    %p46 = por %p44, %p45
    %p47 = scmp.ne.s32.totalorder %s36, %s37
    %p48 = scmp.eq.s32.totalorder %s14, 0
    %p49 = por %p47, %p48
    %p50 = scmp.ne.s32.totalorder %s36, %s37
    %p51 = scmp.eq.s32.totalorder %s15, 1
    %p52 = por %p50, %p51
    %p54 = scmp.ne.s32.totalorder %s37, %s53
    %p55 = scmp.eq.s32.totalorder %s15, 0
    %p56 = por %p54, %p55
    %s57 = ssub.s32 %s16, %s28
    %s58 = ssub.s32 %s17, %s24
    %s59 = sor.u32 %s57, %s58
    %p60 = scmp.eq.s32.totalorder %s59, 0
    %s62 = sadd.s32 %s61, 1
    %s63 = scalar_select %p60, %s61, %s62
    %p66 = pneg %p60
    %p67 = scmp.eq.s32.totalorder %s9, 1
    %p68 = por %p66, %p67
    %p69 = scmp.ne.s32.totalorder %s61, %s64
    %p70 = scmp.eq.s32.totalorder %s9, 0
    %p71 = por %p69, %p70
    %p72 = scmp.ne.s32.totalorder %s61, %s64
    %p73 = scmp.eq.s32.totalorder %s14, 1
    %p74 = por %p72, %p73
    %p75 = scmp.ne.s32.totalorder %s64, %s65
    %p76 = scmp.eq.s32.totalorder %s14, 0
    %p77 = por %p75, %p76
    %p78 = scmp.ne.s32.totalorder %s64, %s65
    %p79 = scmp.eq.s32.totalorder %s15, 1
    %p80 = por %p78, %p79
    %p82 = scmp.ne.s32.totalorder %s65, %s81
    %p83 = scmp.eq.s32.totalorder %s15, 0
    %p84 = por %p82, %p83
    %s85 = ssub.s32 %s16, %s28
    %s86 = ssub.s32 %s17, %s24
    %s87 = sor.u32 %s85, %s86
    %p88 = scmp.eq.s32.totalorder %s87, 0
    %s90 = sadd.s32 %s89, 1
    %s91 = scalar_select %p88, %s89, %s90
    %p94 = pneg %p88
    %p95 = scmp.eq.s32.totalorder %s9, 1
    %p96 = por %p94, %p95
    %p97 = scmp.ne.s32.totalorder %s89, %s92
    %p98 = scmp.eq.s32.totalorder %s9, 0
    %p99 = por %p97, %p98
    %p100 = scmp.ne.s32.totalorder %s89, %s92
    %p101 = scmp.eq.s32.totalorder %s14, 1
    %p102 = por %p100, %p101
    %p103 = scmp.ne.s32.totalorder %s92, %s93
    %p104 = scmp.eq.s32.totalorder %s14, 0
    %p105 = por %p103, %p104
    %p106 = scmp.ne.s32.totalorder %s92, %s93
    %p107 = scmp.eq.s32.totalorder %s15, 1
    %p108 = por %p106, %p107
    %p110 = scmp.ne.s32.totalorder %s93, %s109
    %p111 = scmp.eq.s32.totalorder %s15, 0
    %p112 = por %p110, %p111
    %s113 = ssub.s32 %s16, %s28
    %s114 = ssub.s32 %s17, %s24
    %s115 = sor.u32 %s113, %s114
    %p116 = scmp.eq.s32.totalorder %s115, 0
    %s118 = sadd.s32 %s117, 1
    %s119 = scalar_select %p116, %s117, %s118
    %p122 = pneg %p116
    %p123 = scmp.eq.s32.totalorder %s9, 1
    %p124 = por %p122, %p123
    %p125 = scmp.ne.s32.totalorder %s117, %s120
    %p126 = scmp.eq.s32.totalorder %s9, 0
    %p127 = por %p125, %p126
    %p128 = scmp.ne.s32.totalorder %s117, %s120
    %p129 = scmp.eq.s32.totalorder %s14, 1
    %p130 = por %p128, %p129
    %p131 = scmp.ne.s32.totalorder %s120, %s121
    %p132 = scmp.eq.s32.totalorder %s14, 0
    %p133 = por %p131, %p132
    %p134 = scmp.ne.s32.totalorder %s120, %s121
    %p135 = scmp.eq.s32.totalorder %s15, 1
    %p136 = por %p134, %p135
    %p138 = scmp.ne.s32.totalorder %s121, %s137
    %p139 = scmp.eq.s32.totalorder %s15, 0
    %p140 = por %p138, %p139
    %p141 = scmp.le.s32.totalorder 1, %s9
    %p142 = scmp.lt.s32.totalorder %s9, 3
    %p143 = pnand %p141, %p142
    %p144 = pneg %p143
    // Predicated region
    $region9: #{adain.1} parent=5 // pred_check
      _
    $region10: #{adain.1} parent=5 // pred_check_branch
      %146 = sbr.rel (%p143) target = $region12
    $region11: #{adain.1} parent=5 // pred_region
      %s147 = ssub.s32 %s9, 1
    $region12: #{adain.1} parent=5 // pred_fallthru
      _
    %p148 = scmp.lt.s32.totalorder %s9, 2
    // Predicated region
    $region13: #{adain.1} parent=5 // pred_check
      %p149 = pneg %p148
    $region14: #{adain.1} parent=5 // pred_check_branch
      %151 = sbr.rel (%p149) target = $region16
    $region15: #{adain.1} parent=5 // pred_region
      // Predicated region
      $region17: #{adain.1} parent=15 // pred_check
        %p152 = pneg %p43
      $region18: #{adain.1} parent=15 // pred_check_branch
        %154 = sbr.rel (%p152) target = $region20
      $region19: #{adain.1} parent=15 // pred_region
        %p155 = scmp.lt.s32.totalorder %s16, 1
        %s156 = scalar_select %p155, %s16, 1
        %p157 = scmp.lt.s32.totalorder %s17, 0
        %s158 = scalar_select %p157, %s17, 0
        %s159 = smul.addr %s158, 2
        %s160 = smul.addr %s156, 2
        %s161 = sadd.s32 %s159, %s160
        %s162 = smul.addr %s161, 4
        %s163 = scalar_lea.vmem %s0, %s162
      $region20: #{adain.1} parent=15 // pred_fallthru
        _
      // Predicated region
      $region21: #{adain.1} parent=15 // pred_check
        %p164 = pneg %p71
      $region22: #{adain.1} parent=15 // pred_check_branch
        %166 = sbr.rel (%p164) target = $region24
      $region23: #{adain.1} parent=15 // pred_region
        %p167 = scmp.lt.s32.totalorder %s16, 1
        %s168 = scalar_select %p167, %s16, 1
        %p169 = scmp.lt.s32.totalorder %s17, 0
        %s170 = scalar_select %p169, %s17, 0
        %s171 = sadd.s32 %s170, %s168
        %s172 = smul.addr %s171, 4
        %s173 = scalar_lea.vmem %s1, %s172
      $region24: #{adain.1} parent=15 // pred_fallthru
        _
      // Predicated region
      $region25: #{adain.1} parent=15 // pred_check
        %p174 = pneg %p99
      $region26: #{adain.1} parent=15 // pred_check_branch
        %176 = sbr.rel (%p174) target = $region28
      $region27: #{adain.1} parent=15 // pred_region
        %p177 = scmp.lt.s32.totalorder %s16, 1
        %s178 = scalar_select %p177, %s16, 1
        %p179 = scmp.lt.s32.totalorder %s17, 0
        %s180 = scalar_select %p179, %s17, 0
        %s181 = sadd.s32 %s180, %s178
        %s182 = smul.addr %s181, 4
        %s183 = scalar_lea.vmem %s2, %s182
      $region28: #{adain.1} parent=15 // pred_fallthru
        _
    $region16: #{adain.1} parent=5 // pred_fallthru
      _
    %p184 = scmp.le.s32.totalorder 1, %s9
    %p185 = scmp.lt.s32.totalorder %s9, 3
    %p186 = pnand %p184, %p185
    %p187 = pneg %p186
    // Predicated region
    $region29: #{adain.1} parent=5 // pred_check
      _
    $region30: #{adain.1} parent=5 // pred_check_branch
      %189 = sbr.rel (%p186) target = $region32
    $region31: #{adain.1} parent=5 // pred_region
      %s190 = ssub.s32 %s9, 1
      %p191 = scmp.lt.s32.totalorder %s18, 1
      %s192 = scalar_select %p191, %s18, 1
      %p193 = scmp.lt.s32.totalorder %s19, 0
      %s194 = scalar_select %p193, %s19, 0
      %s195 = smul.addr %s194, 2
      %s196 = smul.addr %s192, 2
      %s197 = sadd.s32 %s195, %s196
      %s198 = smul.addr %s197, 4
      %s199 = scalar_lea.vmem %s0, %s198
      %p200 = pneg %p49
      %p201 = pneg %p46
      %p202 = scmp.lt.s32.totalorder %s18, 1
      %s203 = scalar_select %p202, %s18, 1
      %p204 = scmp.lt.s32.totalorder %s19, 0
      %s205 = scalar_select %p204, %s19, 0
      %s206 = sadd.s32 %s205, %s203
      %s207 = smul.addr %s206, 4
      %s208 = scalar_lea.vmem %s1, %s207
      %p209 = pneg %p77
      %p210 = pneg %p74
      %p211 = scmp.lt.s32.totalorder %s18, 1
      %s212 = scalar_select %p211, %s18, 1
      %p213 = scmp.lt.s32.totalorder %s19, 0
      %s214 = scalar_select %p213, %s19, 0
      %s215 = sadd.s32 %s214, %s212
      %s216 = smul.addr %s215, 4
      %s217 = scalar_lea.vmem %s2, %s216
      %p218 = pneg %p105
      %p219 = pneg %p102
      %p220 = pneg %p133
      %p221 = pneg %p130
      %p222 = scmp.lt.s32.totalorder %s18, 1
      %s223 = scalar_select %p222, %s18, 1
      %p224 = scmp.lt.s32.totalorder %s19, 0
      %s225 = scalar_select %p224, %s19, 0
      %s226 = smul.addr %s225, 2
      %s227 = smul.addr %s223, 2
      %s228 = sadd.s32 %s226, %s227
      %s229 = smul.addr %s228, 4
      %s230 = scalar_lea.vmem %s3, %s229
      %p231 = scmp.lt.s32.totalorder %s18, 1
      %s232 = scalar_select %p231, %s18, 1
      %p233 = scmp.lt.s32.totalorder %s19, 0
      %s234 = scalar_select %p233, %s19, 0
      %s235 = smul.addr %s234, 2
      %s236 = smul.addr %s232, 2
      %s237 = sadd.s32 %s235, %s236
      %s238 = smul.addr %s237, 4
      %s239 = scalar_lea.vmem %s0, %s238
      %p240 = scmp.lt.s32.totalorder %s18, 1
      %s241 = scalar_select %p240, %s18, 1
      %p242 = scmp.lt.s32.totalorder %s19, 0
      %s243 = scalar_select %p242, %s19, 0
      %s244 = sadd.s32 %s243, %s241
      %s245 = smul.addr %s244, 4
      %s246 = scalar_lea.vmem %s1, %s245
      %p247 = scmp.lt.s32.totalorder %s18, 1
      %s248 = scalar_select %p247, %s18, 1
      %p249 = scmp.lt.s32.totalorder %s19, 0
      %s250 = scalar_select %p249, %s19, 0
      %s251 = sadd.s32 %s250, %s248
      %s252 = smul.addr %s251, 4
      %s253 = scalar_lea.vmem %s2, %s252
      %p254 = scmp.lt.s32.totalorder %s18, 1
      %s255 = scalar_select %p254, %s18, 1
      %p256 = scmp.lt.s32.totalorder %s19, 0
      %s257 = scalar_select %p256, %s19, 0
      %s258 = smul.addr %s257, 2
      %s259 = smul.addr %s255, 2
      %s260 = sadd.s32 %s258, %s259
      %s261 = smul.addr %s260, 4
      %s262 = scalar_lea.vmem %s3, %s261
      %v263 = vld [vmem:[%s239] sm:$0xff]
      %v265 = vcombine.high %v263, %v263
      %vm267 = vcmask 1043456
      %v268 = vsel %vm267, %v263, 0.0
      %v269 = vsel %vm267, %v265, 0.0
      %v270 = vadd.f32 %v268, %v269
      %271 = vadd.xlane.f32.xlu0 %v270
      %v272 = vpop.xlane.xlu0 %271
      %v273 = vrcp.pop 256.0
      %v274 = vmul.f32 %v272, %v273
      %v277 = vunpack.c.l.s4 839922192
      %v278 = vunpack.c.0.s8 %v277
      %v279 = vlaneseq
      %v280 = vshrl.u32 %v279, 7
      %v281 = vsub.s32 %v278, %v280
      %v282 = vrot.slane %v274, %v281
      %v284 = vsub.f32 %v263, %v282
      %v285 = vmul.f32 %v284, %v284
      %v287 = vcombine.high %v285, %v285
      %v289 = vsel %vm267, %v285, 0.0
      %v290 = vsel %vm267, %v287, 0.0
      %v291 = vadd.f32 %v289, %v290
      %292 = vadd.xlane.f32.xlu0 %v291
      %v293 = vpop.xlane.xlu0 %292
      %v294 = vmul.f32 %v293, 0.003921569
      %v295 = vadd.f32 %v294, 1e-05
      %v296 = vrsqrt.pop %v295
      %v297 = vld [vmem:[%s246] sm:$0xf]
      %v298 = vmul.f32 %v296, %v297
      %v299 = vld [vmem:[%s253] sm:$0xf]
      %301 = vset.pattern.permute.xlu0 0
      %302 = vperm.xlu0 %301, %v298
      %v303 = vpop.permute.xlu0 %302
      %v305 = vunpack.c.l.s4 839922192
      %v306 = vunpack.c.0.s8 %v305
      %v307 = vlaneseq
      %v308 = vshrl.u32 %v307, 7
      %v309 = vsub.s32 %v306, %v308
      %v310 = vrot.slane %v303, %v309
      %v312 = vmul.f32 %v284, %v310
      %314 = vset.pattern.permute.xlu0 0
      %315 = vperm.xlu0 %314, %v299
      %v316 = vpop.permute.xlu0 %315
      %v318 = vunpack.c.l.s4 839922192
      %v319 = vunpack.c.0.s8 %v318
      %v320 = vlaneseq
      %v321 = vshrl.u32 %v320, 7
      %v322 = vsub.s32 %v319, %v321
      %v323 = vrot.slane %v316, %v322
      %v325 = vadd.f32 %v312, %v323
      %326 = vst [vmem:[%s262] sm:$0xff] %v325
      %p327 = scmp.lt.s32.totalorder %s18, 1
      %s328 = scalar_select %p327, %s18, 1
      %p329 = scmp.lt.s32.totalorder %s19, 0
      %s330 = scalar_select %p329, %s19, 0
      %s331 = smul.addr %s330, 2
      %s332 = smul.addr %s328, 2
      %s333 = sadd.s32 %s331, %s332
      %s334 = smul.addr %s333, 4
      %s335 = scalar_lea.vmem %s3, %s334
      // Predicated region
      $region33: #{adain.1} parent=31 // pred_check
        %p336 = pneg %p130
      $region34: #{adain.1} parent=31 // pred_check_branch
        %338 = sbr.rel (%p336) target = $region36
      $region35: #{adain.1} parent=31 // pred_region
        _
      $region36: #{adain.1} parent=31 // pred_fallthru
        _
    $region32: #{adain.1} parent=5 // pred_fallthru
      _
    %p339 = scmp.le.s32.totalorder 2, %s9
    // Predicated region
    $region37: #{adain.1} parent=5 // pred_check
      %p340 = pneg %p339
    $region38: #{adain.1} parent=5 // pred_check_branch
      %342 = sbr.rel (%p340) target = $region40
    $region39: #{adain.1} parent=5 // pred_region
      %s343 = ssub.s32 %s9, 2
      // Predicated region
      $region41: #{adain.1} parent=39 // pred_check
        %p344 = pneg %p136
      $region42: #{adain.1} parent=39 // pred_check_branch
        %346 = sbr.rel (%p344) target = $region44
      $region43: #{adain.1} parent=39 // pred_region
        %p347 = scmp.lt.s32.totalorder %s20, 1
        %s348 = scalar_select %p347, %s20, 1
        %p349 = scmp.lt.s32.totalorder %s21, 0
        %s350 = scalar_select %p349, %s21, 0
        %s351 = smul.addr %s350, 2
        %s352 = smul.addr %s348, 2
        %s353 = sadd.s32 %s351, %s352
        %s354 = smul.addr %s353, 4
        %s355 = scalar_lea.vmem %s3, %s354
      $region44: #{adain.1} parent=39 // pred_fallthru
        _
    $region40: #{adain.1} parent=5 // pred_fallthru
      _
  $region6: #{adain.1} parent=0 // loop_footer
    %s13 = sadd.s32 1, %s9
  $region7: #{adain.1} parent=0 // loop_footer_branch
    %8 = sbr.rel target = $region3
  $region8: #{adain.1} parent=0 // loop_exit
    _

</llo_original>
